<compile_context>
chip_gen: v7x
topology: tpu7x:2x2x1
jax: 0.10.0
libtpu: 0.0.40
codegen_flags: <defaults>
</compile_context>

<pallas_src>
import functools

import numpy as np
import jax
import jax.numpy as jnp
from jax import lax
from jax.experimental import pallas as pl
from jax.experimental.pallas import tpu as pltpu


# ----------------------------------------------------------------------------
# Host-side (static) setup: mirror SparseMaxPool.__init__
# ----------------------------------------------------------------------------
def build_sparse_structure(pooling_counts, N):
    """Rebuild mask2d (for the reference) and the static group structure.

    Returns:
      mask2d:     (N, N) int32 numpy array, exactly as built by __init__.
      groups:     tuple of (base_offset, stride, count) per pooling group.
      max_offset: largest active offset that actually lands inside the map
                  (offsets >= N write nothing).
    """
    mask2d = np.zeros((N, N), dtype=np.int32)
    mask2d[np.arange(N), np.arange(N)] = 1
    groups = []
    stride, offset = 1, 0
    max_offset = 0
    for c in pooling_counts:
        groups.append((int(offset), int(stride), int(c)))
        for _ in range(c):
            offset += stride
            if offset < N:
                i = np.arange(0, N - offset, stride)
                mask2d[i, i + offset] = 1
                max_offset = max(max_offset, offset)
        stride *= 2
    return mask2d, tuple(groups), max_offset


def _neg_fill(dtype):
    dtype = jnp.dtype(dtype)
    if jnp.issubdtype(dtype, jnp.floating):
        return float("-inf")
    return int(jnp.iinfo(dtype).min)


# ----------------------------------------------------------------------------
# Pallas kernel
# ----------------------------------------------------------------------------
def _sparse_maxpool_kernel(x_ref, o_ref, *, N, n_steps, groups, flat):
    # x_ref: (TD, N) ; o_ref: (TD, N*N) if flat else (TD, N, N)
    x = x_ref[...]
    td = x.shape[0]
    dtype = x.dtype
    fill = _neg_fill(dtype)

    if flat:
        # Work directly in the lane-dense flattened layout p = i*N + j.
        nn = N * N
        log2n = N.bit_length() - 1                      # N is a power of two
        p = lax.broadcasted_iota(jnp.int32, (1, nn), 1)
        i_idx = jnp.right_shift(p, log2n)               # i = p // N
        j_idx = p & (N - 1)                             # j = p %  N

        # Tile x along lanes so xt[d, i*N + j] = x[d, j] (doubling concat).
        xt = x
        while xt.shape[-1] < nn:
            xt = jnp.concatenate([xt, xt], axis=-1)

        # y[d, i*N+j] = x[d, j] for j >= i else -inf (seed of the scan).
        y = jnp.where(j_idx >= i_idx, xt, fill)

        # Doubling scan: after step t (shifts 1,2,...,2^(t-1)),
        #   y[d, i, j] = max(x[d, max(i, j - (2^t - 1)) : j + 1]).
        s = 1
        for _ in range(n_steps):
            shifted = jnp.concatenate(
                [jnp.full((td, s), fill, dtype), y[:, : nn - s]], axis=-1)
            # never let the flat shift pull values across a row (i) boundary
            shifted = jnp.where(j_idx >= s, shifted, fill)
            y = jnp.maximum(y, shifted)
            s *= 2
    else:
        # Plain (TD, N, N) layout (used when N >= 128 or N not a power of 2;
        # the minor dim is then already lane-dense / full-extent).
        i_idx = lax.broadcasted_iota(jnp.int32, (1, N, N), 1)
        j_idx = lax.broadcasted_iota(jnp.int32, (1, N, N), 2)
        xb = jnp.broadcast_to(x[:, None, :], (td, N, N))
        y = jnp.where(j_idx >= i_idx, xb, fill)
        s = 1
        for _ in range(n_steps):
            shifted = jnp.concatenate(
                [jnp.full((td, N, s), fill, dtype), y[:, :, : N - s]], axis=-1)
            y = jnp.maximum(y, shifted)
            s *= 2

    # Sparse write mask: diagonal plus, for each pooling group
    # (base, stride, count): offsets base+stride ... base+stride*count in steps
    # of `stride`, restricted to rows i with i % stride == 0.  Strides are
    # powers of two, so modulo is a bitwise AND.
    off = j_idx - i_idx
    mask = off == 0
    for base, stride, count in groups:
        g = (off > base) & (off <= base + stride * count)
        g = g & (((off - base) & (stride - 1)) == 0)
        g = g & ((i_idx & (stride - 1)) == 0)
        mask = mask | g

    o_ref[...] = jnp.where(mask, y, jnp.zeros_like(y))


# ----------------------------------------------------------------------------
# Wrapper
# ----------------------------------------------------------------------------
def _choose_d_tile(D, N, itemsize, target_bytes=4 * 1024 * 1024):
    """Largest D-tile that divides D, is a multiple of 8 (layout rule), and
    keeps one output block at ~a few MiB (safe for v7x's 64 MiB VMEM when
    double-buffered; raise target_bytes on v6e/v5e if desired)."""
    if D % 8 != 0:
        return D                                   # small / odd D: take it whole
    best = 8
    for td in range(8, D + 1, 8):
        if D % td == 0 and td * N * N * itemsize <= target_bytes:
            best = td
    return best


def sparse_max_pool(x, pooling_counts):
    """out[b, d, i, j] = max(x[b, d, i:j+1]) on the SparseMaxPool mask, else 0."""
    B, D, N = x.shape
    _, groups, max_offset = build_sparse_structure(pooling_counts, N)
    n_steps = max_offset.bit_length()              # 2**n_steps - 1 >= max_offset

    # Lane-dense flattened output for the typical CCA case (N = 16/32/64).
    flat = (N & (N - 1) == 0) and N < 128

    td = _choose_d_tile(D, N, x.dtype.itemsize)
    grid = (B, D // td)

    kernel = functools.partial(
        _sparse_maxpool_kernel, N=N, n_steps=n_steps, groups=groups, flat=flat)

    in_specs = [pl.BlockSpec((None, td, N), lambda b, d: (b, d, 0))]
    if flat:
        out_shape = jax.ShapeDtypeStruct((B, D, N * N), x.dtype)
        out_specs = pl.BlockSpec((None, td, N * N), lambda b, d: (b, d, 0))
    else:
        out_shape = jax.ShapeDtypeStruct((B, D, N, N), x.dtype)
        out_specs = pl.BlockSpec((None, td, N, N), lambda b, d: (b, d, 0, 0))

    out = pl.pallas_call(
        kernel,
        out_shape=out_shape,
        grid=grid,
        in_specs=in_specs,
        out_specs=out_specs,
        compiler_params=pltpu.CompilerParams(
            dimension_semantics=("parallel", "parallel"),
            vmem_limit_bytes=32 * 1024 * 1024,
        ),
    )(x)

    if flat:
        out = out.reshape(B, D, N, N)              # contiguous -> free
    return out


# ----------------------------------------------------------------------------
# Pure numpy reference (same semantics as the PyTorch forward)
# ----------------------------------------------------------------------------
def reference(x, mask2d):
    x = np.asarray(x)
    B, D, N = x.shape
    out = np.zeros((B, D, N, N), dtype=x.dtype)
    for i in range(N):
        for j in range(N):
            if mask2d[i, j]:
                out[:, :, i, j] = x[:, :, i:j + 1].max(axis=-1)
    return out


if __name__ == "__main__":
    # Small shapes consistent with the module: x is (B, D, N)
    B, D, N = 2, 4, 16
    pooling_counts = [3, 2]

    key = jax.random.PRNGKey(0)
    x = jax.random.normal(key, (B, D, N), dtype=jnp.float32)

    out = sparse_max_pool(x, pooling_counts)
    out = jax.block_until_ready(out)

    mask2d_np, _, _ = build_sparse_structure(pooling_counts, N)
    ref = reference(np.asarray(x), mask2d_np)
    np.testing.assert_allclose(np.asarray(out), ref, rtol=0, atol=0)

    print("KERNEL_OK")
</pallas_src>

<mosaic_0001>
module attributes {stable_mosaic.version = 11 : i64} {
  func.func @_sparse_maxpool_kernel(%arg0: i32, %arg1: i32, %arg2: memref<1x4x16xf32, #tpu.memory_space<vmem>>, %arg3: memref<1x4x256xf32, #tpu.memory_space<vmem>>) attributes {dimension_semantics = [#tpu.dimension_semantics<parallel>, #tpu.dimension_semantics<parallel>], iteration_bounds = array<i64: 2, 1>, scalar_prefetch = 0 : i64, scratch_operands = 0 : i64, tpu.core_type = #tpu.core_type<tc>, window_params = [{transform_indices = @transform_0, window_bounds = array<i64: 1, 4, 16>}, {transform_indices = @transform_1, window_bounds = array<i64: 1, 4, 256>}]} {
    %c0 = arith.constant 0 : index
    %c0_0 = arith.constant 0 : index
    %c0_1 = arith.constant 0 : index
    %0 = vector.load %arg2[%c0, %c0_0, %c0_1] : memref<1x4x16xf32, #tpu.memory_space<vmem>>, vector<1x4x16xf32>
    %1 = vector.shape_cast %0 : vector<1x4x16xf32> to vector<4x16xf32>
    %2 = tpu.iota {dimensions = array<i32: 1>} : vector<1x256xi32>
    %c4_i32 = arith.constant 4 : i32
    %3 = vector.broadcast %c4_i32 : i32 to vector<1x256xi32>
    %4 = arith.shrsi %2, %3 : vector<1x256xi32>
    %c15_i32 = arith.constant 15 : i32
    %5 = vector.broadcast %c15_i32 : i32 to vector<1x256xi32>
    %6 = arith.andi %2, %5 : vector<1x256xi32>
    %7 = tpu.concatenate %1, %1 in 1 : vector<4x16xf32>, vector<4x16xf32> -> vector<4x32xf32>
    %8 = tpu.concatenate %7, %7 in 1 : vector<4x32xf32>, vector<4x32xf32> -> vector<4x64xf32>
    %9 = tpu.concatenate %8, %8 in 1 : vector<4x64xf32>, vector<4x64xf32> -> vector<4x128xf32>
    %10 = tpu.concatenate %9, %9 in 1 : vector<4x128xf32>, vector<4x128xf32> -> vector<4x256xf32>
    %11 = arith.cmpi sge, %6, %4 : vector<1x256xi32>
    %cst = arith.constant 0xFF800000 : f32
    %12 = vector.shape_cast %11 : vector<1x256xi1> to vector<1x256xi1>
    %13 = vector.broadcast %12 : vector<1x256xi1> to vector<4x256xi1>
    %14 = vector.broadcast %cst : f32 to vector<4x256xf32>
    %15 = arith.select %13, %10, %14 : vector<4x256xi1>, vector<4x256xf32>
    %cst_2 = arith.constant 0xFF800000 : f32
    %16 = vector.broadcast %cst_2 : f32 to vector<4x1xf32>
    %17 = vector.extract_strided_slice %15 {offsets = [0, 0], sizes = [4, 255], strides = [1, 1]} : vector<4x256xf32> to vector<4x255xf32>
    %18 = tpu.concatenate %16, %17 in 1 : vector<4x1xf32>, vector<4x255xf32> -> vector<4x256xf32>
    %c1_i32 = arith.constant 1 : i32
    %19 = vector.broadcast %c1_i32 : i32 to vector<1x256xi32>
    %20 = arith.cmpi sge, %6, %19 : vector<1x256xi32>
    %cst_3 = arith.constant 0xFF800000 : f32
    %21 = vector.shape_cast %20 : vector<1x256xi1> to vector<1x256xi1>
    %22 = vector.broadcast %21 : vector<1x256xi1> to vector<4x256xi1>
    %23 = vector.broadcast %cst_3 : f32 to vector<4x256xf32>
    %24 = arith.select %22, %18, %23 : vector<4x256xi1>, vector<4x256xf32>
    %25 = arith.maximumf %15, %24 : vector<4x256xf32>
    %cst_4 = arith.constant 0xFF800000 : f32
    %26 = vector.broadcast %cst_4 : f32 to vector<4x2xf32>
    %27 = vector.extract_strided_slice %25 {offsets = [0, 0], sizes = [4, 254], strides = [1, 1]} : vector<4x256xf32> to vector<4x254xf32>
    %28 = tpu.concatenate %26, %27 in 1 : vector<4x2xf32>, vector<4x254xf32> -> vector<4x256xf32>
    %c2_i32 = arith.constant 2 : i32
    %29 = vector.broadcast %c2_i32 : i32 to vector<1x256xi32>
    %30 = arith.cmpi sge, %6, %29 : vector<1x256xi32>
    %cst_5 = arith.constant 0xFF800000 : f32
    %31 = vector.shape_cast %30 : vector<1x256xi1> to vector<1x256xi1>
    %32 = vector.broadcast %31 : vector<1x256xi1> to vector<4x256xi1>
    %33 = vector.broadcast %cst_5 : f32 to vector<4x256xf32>
    %34 = arith.select %32, %28, %33 : vector<4x256xi1>, vector<4x256xf32>
    %35 = arith.maximumf %25, %34 : vector<4x256xf32>
    %cst_6 = arith.constant 0xFF800000 : f32
    %36 = vector.broadcast %cst_6 : f32 to vector<4x4xf32>
    %37 = vector.extract_strided_slice %35 {offsets = [0, 0], sizes = [4, 252], strides = [1, 1]} : vector<4x256xf32> to vector<4x252xf32>
    %38 = tpu.concatenate %36, %37 in 1 : vector<4x4xf32>, vector<4x252xf32> -> vector<4x256xf32>
    %c4_i32_7 = arith.constant 4 : i32
    %39 = vector.broadcast %c4_i32_7 : i32 to vector<1x256xi32>
    %40 = arith.cmpi sge, %6, %39 : vector<1x256xi32>
    %cst_8 = arith.constant 0xFF800000 : f32
    %41 = vector.shape_cast %40 : vector<1x256xi1> to vector<1x256xi1>
    %42 = vector.broadcast %41 : vector<1x256xi1> to vector<4x256xi1>
    %43 = vector.broadcast %cst_8 : f32 to vector<4x256xf32>
    %44 = arith.select %42, %38, %43 : vector<4x256xi1>, vector<4x256xf32>
    %45 = arith.maximumf %35, %44 : vector<4x256xf32>
    %46 = arith.subi %6, %4 : vector<1x256xi32>
    %c0_i32 = arith.constant 0 : i32
    %47 = vector.broadcast %c0_i32 : i32 to vector<1x256xi32>
    %48 = arith.cmpi eq, %46, %47 : vector<1x256xi32>
    %c0_i32_9 = arith.constant 0 : i32
    %49 = vector.broadcast %c0_i32_9 : i32 to vector<1x256xi32>
    %50 = arith.cmpi sgt, %46, %49 : vector<1x256xi32>
    %c3_i32 = arith.constant 3 : i32
    %51 = vector.broadcast %c3_i32 : i32 to vector<1x256xi32>
    %52 = arith.cmpi sle, %46, %51 : vector<1x256xi32>
    %53 = arith.andi %50, %52 : vector<1x256xi1>
    %c0_i32_10 = arith.constant 0 : i32
    %54 = vector.broadcast %c0_i32_10 : i32 to vector<1x256xi32>
    %55 = arith.subi %46, %54 : vector<1x256xi32>
    %c0_i32_11 = arith.constant 0 : i32
    %56 = vector.broadcast %c0_i32_11 : i32 to vector<1x256xi32>
    %57 = arith.andi %55, %56 : vector<1x256xi32>
    %c0_i32_12 = arith.constant 0 : i32
    %58 = vector.broadcast %c0_i32_12 : i32 to vector<1x256xi32>
    %59 = arith.cmpi eq, %57, %58 : vector<1x256xi32>
    %60 = arith.andi %53, %59 : vector<1x256xi1>
    %c0_i32_13 = arith.constant 0 : i32
    %61 = vector.broadcast %c0_i32_13 : i32 to vector<1x256xi32>
    %62 = arith.andi %4, %61 : vector<1x256xi32>
    %c0_i32_14 = arith.constant 0 : i32
    %63 = vector.broadcast %c0_i32_14 : i32 to vector<1x256xi32>
    %64 = arith.cmpi eq, %62, %63 : vector<1x256xi32>
    %65 = arith.andi %60, %64 : vector<1x256xi1>
    %66 = arith.ori %48, %65 : vector<1x256xi1>
    %c3_i32_15 = arith.constant 3 : i32
    %67 = vector.broadcast %c3_i32_15 : i32 to vector<1x256xi32>
    %68 = arith.cmpi sgt, %46, %67 : vector<1x256xi32>
    %c7_i32 = arith.constant 7 : i32
    %69 = vector.broadcast %c7_i32 : i32 to vector<1x256xi32>
    %70 = arith.cmpi sle, %46, %69 : vector<1x256xi32>
    %71 = arith.andi %68, %70 : vector<1x256xi1>
    %c3_i32_16 = arith.constant 3 : i32
    %72 = vector.broadcast %c3_i32_16 : i32 to vector<1x256xi32>
    %73 = arith.subi %46, %72 : vector<1x256xi32>
    %c1_i32_17 = arith.constant 1 : i32
    %74 = vector.broadcast %c1_i32_17 : i32 to vector<1x256xi32>
    %75 = arith.andi %73, %74 : vector<1x256xi32>
    %c0_i32_18 = arith.constant 0 : i32
    %76 = vector.broadcast %c0_i32_18 : i32 to vector<1x256xi32>
    %77 = arith.cmpi eq, %75, %76 : vector<1x256xi32>
    %78 = arith.andi %71, %77 : vector<1x256xi1>
    %c1_i32_19 = arith.constant 1 : i32
    %79 = vector.broadcast %c1_i32_19 : i32 to vector<1x256xi32>
    %80 = arith.andi %4, %79 : vector<1x256xi32>
    %c0_i32_20 = arith.constant 0 : i32
    %81 = vector.broadcast %c0_i32_20 : i32 to vector<1x256xi32>
    %82 = arith.cmpi eq, %80, %81 : vector<1x256xi32>
    %83 = arith.andi %78, %82 : vector<1x256xi1>
    %84 = arith.ori %66, %83 : vector<1x256xi1>
    %cst_21 = arith.constant 0.000000e+00 : f32
    %85 = vector.broadcast %cst_21 : f32 to vector<4x256xf32>
    %86 = vector.shape_cast %84 : vector<1x256xi1> to vector<1x256xi1>
    %87 = vector.broadcast %86 : vector<1x256xi1> to vector<4x256xi1>
    %88 = arith.select %87, %45, %85 : vector<4x256xi1>, vector<4x256xf32>
    %c0_22 = arith.constant 0 : index
    %c0_23 = arith.constant 0 : index
    %c0_24 = arith.constant 0 : index
    %89 = vector.load %arg3[%c0_22, %c0_23, %c0_24] : memref<1x4x256xf32, #tpu.memory_space<vmem>>, vector<1x4x256xf32>
    %90 = vector.shape_cast %89 : vector<1x4x256xf32> to vector<4x256xf32>
    %91 = vector.shape_cast %88 : vector<4x256xf32> to vector<1x4x256xf32>
    tpu.vector_store %arg3[%c0_22, %c0_23, %c0_24], %91 {strides = array<i32>} : memref<1x4x256xf32, #tpu.memory_space<vmem>>, vector<1x4x256xf32>,
    return
  }
  func.func @transform_0(%arg0: i32, %arg1: i32) -> (i32, i32, i32) {
    %c0_i32 = arith.constant 0 : i32
    %c0_i32_0 = arith.constant 0 : i32
    return %arg0, %arg1, %c0_i32 : i32, i32, i32
  }
  func.func @transform_1(%arg0: i32, %arg1: i32) -> (i32, i32, i32) {
    %c0_i32 = arith.constant 0 : i32
    %c0_i32_0 = arith.constant 0 : i32
    return %arg0, %arg1, %c0_i32 : i32, i32, i32
  }
}

</mosaic_0001>

<llo_original>
// kernel: tpu_custom_call.1
$region0: #{tpu_custom_call.1}
  #allocation0 [shape = 'u32[]', space=smem, size = 0x4, offset = 0x4, fixed_abs, tag = 'smem constant byte address 0x4 - core index']
  #allocation1 [shape = 'u32[144,128]{1,0:T(1,128)}', space=vmem, size = 0x12000, scoped, tag = 'internal scratch']
  %s0 = inlined_call_operand.hbm [shape: f32[2,4,16], index: 0, kind: input, shape index: {}]
  %s1 = inlined_call_operand.hbm [shape: f32[2,4,256], index: 1, kind: output, shape index: {}]
  %s2 = sld [smem:[#allocation0]]
  $region41: #{tpu_custom_call.1} parent=0
    _
  %s4 = ssub.s32 1, %s2
  %s5 = scalar_select 0, %s4, %s2
  $region1: #{tpu_custom_call.1} parent=0
    #allocation2 [shape = 'u8[4096]{0}', space=vmem, size = 0x1000, scoped, tag = 'input window, operand 0']
    #allocation3 [shape = 's32[2]{0}', space=sflag, size = 0x8, scoped, tag = 'scoped memory for tpu_custom_call.1']
    #allocation4 [shape = 's32[2]{0}', space=sflag, size = 0x8, scoped, tag = 'scoped memory for tpu_custom_call.1']
    #allocation5 [shape = 'u8[8192]{0}', space=vmem, size = 0x2000, scoped, tag = 'output window, operand 0']
    %6 = vsyncpa [#allocation3], 0
    %s7 = scalar_lea.sflag [#allocation3], 1
    %8 = vsyncpa %s7, 0
    %9 = vsyncpa [#allocation4], 0
    %s10 = scalar_lea.sflag [#allocation4], 1
    %11 = vsyncpa %s10, 0
    loop: start=0, step=1, limit=4
    $region2: #{tpu_custom_call.1} parent=1 // loop_pre_header
      _
    $region3: #{tpu_custom_call.1} parent=1 // loop_header
      %s13 = sphi 0, %s17
      %p14 = scmp.ge.s32.totalorder %s13, 4
      %s20 = sphi 0, %s32
      %s21 = sphi 0, %s28
      %s22 = sphi 0, %s20
      %s23 = sphi 0, %s21
      %s24 = sphi 0, %s22
      %s25 = sphi 0, %s23
      %s37 = sphi 0, %s39
      %s40 = sphi 0, %s37
      %s41 = sphi 0, %s40
      %s57 = sphi 0, %s41
      %s65 = sphi 0, %s67
      %s68 = sphi 0, %s65
      %s69 = sphi 0, %s68
      %s85 = sphi 0, %s69
    $region4: #{tpu_custom_call.1} parent=1 // loop_header_branch
      %16 = sbr.rel (%p14) target = $region8
    $region5: #{tpu_custom_call.1} parent=1 // loop_body
      %s18 = ssub.s32 %s13, 1
      %s19 = ssub.s32 %s13, 2
      %s26 = sadd.s32 1, %s21
      %p27 = scmp.ge.s32.totalorder %s26, 1
      %s28 = scalar_select %p27, 0, %s26
      %s29 = sadd.s32 1, %s20
      %s30 = scalar_select %p27, %s29, %s20
      %p31 = scmp.ge.s32.totalorder %s30, 2
      %s32 = scalar_select %p31, 0, %s30
      %s33 = ssub.s32 %s20, %s32
      %s34 = ssub.s32 %s21, %s28
      %s35 = sor.u32 %s33, %s34
      %p36 = scmp.eq.s32.totalorder %s35, 0
      %s38 = sadd.s32 %s37, 1
      %s39 = scalar_select %p36, %s37, %s38
      %p42 = pneg %p36
      %p43 = scmp.eq.s32.totalorder %s13, 1
      %p44 = por %p42, %p43
      %p45 = scmp.ne.s32.totalorder %s37, %s40
      %p46 = scmp.eq.s32.totalorder %s13, 0
      %p47 = por %p45, %p46
      %p48 = scmp.ne.s32.totalorder %s37, %s40
      %p49 = scmp.eq.s32.totalorder %s18, 1
      %p50 = por %p48, %p49
      %p51 = scmp.ne.s32.totalorder %s40, %s41
      %p52 = scmp.eq.s32.totalorder %s18, 0
      %p53 = por %p51, %p52
      %p54 = scmp.ne.s32.totalorder %s40, %s41
      %p55 = scmp.eq.s32.totalorder %s19, 1
      %p56 = por %p54, %p55
      %p58 = scmp.ne.s32.totalorder %s41, %s57
      %p59 = scmp.eq.s32.totalorder %s19, 0
      %p60 = por %p58, %p59
      %s61 = ssub.s32 %s20, %s32
      %s62 = ssub.s32 %s21, %s28
      %s63 = sor.u32 %s61, %s62
      %p64 = scmp.eq.s32.totalorder %s63, 0
      %s66 = sadd.s32 %s65, 1
      %s67 = scalar_select %p64, %s65, %s66
      %p70 = pneg %p64
      %p71 = scmp.eq.s32.totalorder %s13, 1
      %p72 = por %p70, %p71
      %p73 = scmp.ne.s32.totalorder %s65, %s68
      %p74 = scmp.eq.s32.totalorder %s13, 0
      %p75 = por %p73, %p74
      %p76 = scmp.ne.s32.totalorder %s65, %s68
      %p77 = scmp.eq.s32.totalorder %s18, 1
      %p78 = por %p76, %p77
      %p79 = scmp.ne.s32.totalorder %s68, %s69
      %p80 = scmp.eq.s32.totalorder %s18, 0
      %p81 = por %p79, %p80
      %p82 = scmp.ne.s32.totalorder %s68, %s69
      %p83 = scmp.eq.s32.totalorder %s19, 1
      %p84 = por %p82, %p83
      %p86 = scmp.ne.s32.totalorder %s69, %s85
      %p87 = scmp.eq.s32.totalorder %s19, 0
      %p88 = por %p86, %p87
      %p89 = scmp.le.s32.totalorder 1, %s13
      %p90 = scmp.lt.s32.totalorder %s13, 3
      %p91 = pnand %p89, %p90
      %p92 = pneg %p91
      // Predicated region
      $region9: #{tpu_custom_call.1} parent=5 // pred_check
        _
      $region10: #{tpu_custom_call.1} parent=5 // pred_check_branch
        %94 = sbr.rel (%p91) target = $region12
      $region11: #{tpu_custom_call.1} parent=5 // pred_region
        %s95 = ssub.s32 %s13, 1
      $region12: #{tpu_custom_call.1} parent=5 // pred_fallthru
        _
      %p96 = scmp.lt.s32.totalorder %s13, 2
      // Predicated region
      $region13: #{tpu_custom_call.1} parent=5 // pred_check
        %p97 = pneg %p96
      $region14: #{tpu_custom_call.1} parent=5 // pred_check_branch
        %99 = sbr.rel (%p97) target = $region16
      $region15: #{tpu_custom_call.1} parent=5 // pred_region
        // Predicated region
        $region17: #{tpu_custom_call.1} parent=15 // pred_check
          %p100 = pneg %p47
        $region18: #{tpu_custom_call.1} parent=15 // pred_check_branch
          %102 = sbr.rel (%p100) target = $region20
        $region19: #{tpu_custom_call.1} parent=15 // pred_region
          %s103 = sand.u32 %s37, 1
          %s104 = scalar_lea.sflag [#allocation3], %s103
          %s105 = sand.u32 %s37, 1
          %s106 = smul.addr %s105, 4
          %s107 = scalar_lea.vmem [#allocation2], %s106
          %s109 = ssub.s32 64, 64
          %110 = vsyncadd %s104, %s109
          %s111 = sadd.s32 %s21, %s20
          %s112 = smul.addr %s111, 64
          %s113 = scalar_lea.hbm %s0, %s112
          %s115 = sshll.u32 %s107, 4
          %s116 = int_to_ptr.vmem [resolvable:$true] %s115
          %118 = dma.hbm_to_vmem [thread:$0]  %s113, 64, %s116, %s104
        $region20: #{tpu_custom_call.1} parent=15 // pred_fallthru
          _
      $region16: #{tpu_custom_call.1} parent=5 // pred_fallthru
        _
      %p119 = scmp.le.s32.totalorder 1, %s13
      %p120 = scmp.lt.s32.totalorder %s13, 3
      %p121 = pnand %p119, %p120
      %p122 = pneg %p121
      // Predicated region
      $region21: #{tpu_custom_call.1} parent=5 // pred_check
        _
      $region22: #{tpu_custom_call.1} parent=5 // pred_check_branch
        %124 = sbr.rel (%p121) target = $region24
      $region23: #{tpu_custom_call.1} parent=5 // pred_region
        %s125 = ssub.s32 %s13, 1
        %s126 = sand.u32 %s40, 1
        %s127 = scalar_lea.sflag [#allocation3], %s126
        %s128 = sand.u32 %s40, 1
        %s129 = smul.addr %s128, 4
        %s130 = scalar_lea.vmem [#allocation2], %s129
        // Predicated region
        $region25: #{tpu_custom_call.1} parent=23 // pred_check
          %p131 = pneg %p53
        $region26: #{tpu_custom_call.1} parent=23 // pred_check_branch
          %133 = sbr.rel (%p131) target = $region28
        $region27: #{tpu_custom_call.1} parent=23 // pred_region
          %134 = dma.done %s127, 64
        $region28: #{tpu_custom_call.1} parent=23 // pred_fallthru
          _
        %s135 = sand.u32 %s40, 1
        %s136 = scalar_lea.sflag [#allocation3], %s135
        %s137 = sand.u32 %s40, 1
        %s138 = smul.addr %s137, 4
        %s139 = scalar_lea.vmem [#allocation2], %s138
        %p140 = pneg %p53
        %p141 = pneg %p50
        %p142 = pneg %p81
        %p143 = pneg %p78
        %s144 = sand.u32 %s68, 1
        %s145 = scalar_lea.sflag [#allocation4], %s144
        %s146 = sand.u32 %s68, 1
        %s147 = smul.addr %s146, 8
        %s148 = scalar_lea.vmem [#allocation5], %s147
        %v149 = vld [vmem:[%s130] sm:$0xf]
        %v150 = vlaneseq
        %v151 = vand.u32 %v150, 127
        %v152 = vadd.s32 %v151, 128
        %v153 = vshra.s32 %v151, 4
        %v154 = vshra.s32 %v152, 4
        %v155 = vand.u32 %v151, 15
        %v156 = vand.u32 %v152, 15
        %158 = vrot.lane.b32.xlu0 %v149, 16
        %v159 = vpop.permute.xlu0 %158
        %vm161 = vcmask 130048
        %v162 = vsel %vm161, %v149, %v159
        %164 = vrot.lane.b32.xlu0 %v162, 32
        %v165 = vpop.permute.xlu0 %164
        %vm167 = vcmask 261120
        %v168 = vsel %vm167, %v162, %v165
        %170 = vrot.lane.b32.xlu0 %v168, 64
        %v171 = vpop.permute.xlu0 %170
        %vm173 = vcmask 523264
        %v174 = vsel %vm173, %v168, %v171
        %vm175 = vcmp.ge.s32.totalorder %v155, %v153
        %vm176 = vcmp.ge.s32.totalorder %v156, %v154
        %v177 = vsel %vm175, 1, 0
        %v178 = vsel %vm176, 1, 0
        %vm179 = vcmp.eq.s32.totalorder %v177, 1
        %vm180 = vcmp.eq.s32.totalorder %v178, 1
        %v181 = vsel %vm179, %v174, -inf
        %v182 = vsel %vm180, %v174, -inf
        %185 = vrot.lane.b32.xlu0 %v181, 1
        %v186 = vpop.permute.xlu0 %185
        %187 = vrot.lane.b32.xlu0 %v182, 1
        %v188 = vpop.permute.xlu0 %187
        %vm189 = vcmask 7168
        %v190 = vsel %vm189, %v186, %v188
        %v193 = vsel %vm189, -inf, %v186
        %vm194 = vcmp.ge.s32.totalorder %v155, 1
        %vm195 = vcmp.ge.s32.totalorder %v156, 1
        %v196 = vsel %vm194, 1, 0
        %v197 = vsel %vm195, 1, 0
        %vm198 = vcmp.eq.s32.totalorder %v196, 1
        %vm199 = vcmp.eq.s32.totalorder %v197, 1
        %v200 = vsel %vm198, %v193, -inf
        %v201 = vsel %vm199, %v190, -inf
        %v202 = vmax.f32 %v181, %v200
        %v203 = vmax.f32 %v182, %v201
        %206 = vrot.lane.b32.xlu0 %v202, 2
        %v207 = vpop.permute.xlu0 %206
        %208 = vrot.lane.b32.xlu0 %v203, 2
        %v209 = vpop.permute.xlu0 %208
        %vm210 = vcmask 15360
        %v211 = vsel %vm210, %v207, %v209
        %v214 = vsel %vm210, -inf, %v207
        %vm215 = vcmp.ge.s32.totalorder %v155, 2
        %vm216 = vcmp.ge.s32.totalorder %v156, 2
        %v217 = vsel %vm215, 1, 0
        %v218 = vsel %vm216, 1, 0
        %vm219 = vcmp.eq.s32.totalorder %v217, 1
        %vm220 = vcmp.eq.s32.totalorder %v218, 1
        %v221 = vsel %vm219, %v214, -inf
        %v222 = vsel %vm220, %v211, -inf
        %v223 = vmax.f32 %v202, %v221
        %v224 = vmax.f32 %v203, %v222
        %227 = vrot.lane.b32.xlu0 %v223, 4
        %v228 = vpop.permute.xlu0 %227
        %229 = vrot.lane.b32.xlu0 %v224, 4
        %v230 = vpop.permute.xlu0 %229
        %vm231 = vcmask 31744
        %v232 = vsel %vm231, %v228, %v230
        %v235 = vsel %vm231, -inf, %v228
        %vm236 = vcmp.ge.s32.totalorder %v155, 4
        %vm237 = vcmp.ge.s32.totalorder %v156, 4
        %v238 = vsel %vm236, 1, 0
        %v239 = vsel %vm237, 1, 0
        %vm240 = vcmp.eq.s32.totalorder %v238, 1
        %vm241 = vcmp.eq.s32.totalorder %v239, 1
        %v242 = vsel %vm240, %v235, -inf
        %v243 = vsel %vm241, %v232, -inf
        %v244 = vmax.f32 %v223, %v242
        %v245 = vmax.f32 %v224, %v243
        %v246 = vsub.s32 %v155, %v153
        %v247 = vsub.s32 %v156, %v154
        %vm248 = vcmp.eq.s32.totalorder %v246, 0
        %vm249 = vcmp.eq.s32.totalorder %v247, 0
        %vm250 = vcmp.gt.s32.totalorder %v246, 0
        %vm251 = vcmp.gt.s32.totalorder %v247, 0
        %vm252 = vcmp.le.s32.totalorder %v246, 3
        %vm253 = vcmp.le.s32.totalorder %v247, 3
        %vm254 = vmand %vm250, %vm252
        %vm255 = vmand %vm251, %vm253
        %vm256 = vmor %vm248, %vm254
        %vm257 = vmor %vm249, %vm255
        %vm258 = vcmp.gt.s32.totalorder %v246, 3
        %vm259 = vcmp.gt.s32.totalorder %v247, 3
        %vm260 = vcmp.le.s32.totalorder %v246, 7
        %vm261 = vcmp.le.s32.totalorder %v247, 7
        %vm262 = vmand %vm258, %vm260
        %vm263 = vmand %vm259, %vm261
        %v264 = vsub.s32 %v246, 3
        %v265 = vsub.s32 %v247, 3
        %v266 = vand.u32 %v264, 1
        %v267 = vand.u32 %v265, 1
        %vm268 = vcmp.eq.s32.totalorder %v266, 0
        %vm269 = vcmp.eq.s32.totalorder %v267, 0
        %vm270 = vmand %vm262, %vm268
        %vm271 = vmand %vm263, %vm269
        %v272 = vand.u32 %v153, 1
        %v273 = vand.u32 %v154, 1
        %vm274 = vcmp.eq.s32.totalorder %v272, 0
        %vm275 = vcmp.eq.s32.totalorder %v273, 0
        %vm276 = vmand %vm270, %vm274
        %vm277 = vmand %vm271, %vm275
        %vm278 = vmor %vm256, %vm276
        %vm279 = vmor %vm257, %vm277
        %v280 = vsel %vm278, 1, 0
        %v281 = vsel %vm279, 1, 0
        %vm282 = vcmp.eq.s32.totalorder %v280, 1
        %vm283 = vcmp.eq.s32.totalorder %v281, 1
        %v284 = vsel %vm282, %v244, 0.0
        %v285 = vsel %vm283, %v245, 0.0
        %v288 = vcombine.low %v284, %v285
        %290 = vst [vmem:[%s148] sm:$0xff] %v288
        %s291 = sand.u32 %s68, 1
        %s292 = scalar_lea.sflag [#allocation4], %s291
        %s293 = sand.u32 %s68, 1
        %s294 = smul.addr %s293, 8
        %s295 = scalar_lea.vmem [#allocation5], %s294
        // Predicated region
        $region29: #{tpu_custom_call.1} parent=23 // pred_check
          %p296 = pneg %p78
        $region30: #{tpu_custom_call.1} parent=23 // pred_check_branch
          %298 = sbr.rel (%p296) target = $region32
        $region31: #{tpu_custom_call.1} parent=23 // pred_region
          %s300 = ssub.s32 128, 128
          %301 = vsyncadd %s292, %s300
          %s302 = smul.addr %s23, 2
          %s303 = smul.addr %s22, 2
          %s304 = sadd.s32 %s302, %s303
          %s305 = smul.addr %s304, 64
          %s306 = scalar_lea.hbm %s1, %s305
          %s308 = sshll.u32 %s295, 4
          %s309 = int_to_ptr.vmem [resolvable:$true] %s308
          %311 = dma.vmem_to_hbm [thread:$0]  %s309, 128, %s306, %s292
        $region32: #{tpu_custom_call.1} parent=23 // pred_fallthru
          _
      $region24: #{tpu_custom_call.1} parent=5 // pred_fallthru
        _
      %p312 = scmp.le.s32.totalorder 2, %s13
      // Predicated region
      $region33: #{tpu_custom_call.1} parent=5 // pred_check
        %p313 = pneg %p312
      $region34: #{tpu_custom_call.1} parent=5 // pred_check_branch
        %315 = sbr.rel (%p313) target = $region36
      $region35: #{tpu_custom_call.1} parent=5 // pred_region
        %s316 = ssub.s32 %s13, 2
        // Predicated region
        $region37: #{tpu_custom_call.1} parent=35 // pred_check
          %p317 = pneg %p84
        $region38: #{tpu_custom_call.1} parent=35 // pred_check_branch
          %319 = sbr.rel (%p317) target = $region40
        $region39: #{tpu_custom_call.1} parent=35 // pred_region
          %s320 = sand.u32 %s69, 1
          %s321 = scalar_lea.sflag [#allocation4], %s320
          %s322 = sand.u32 %s69, 1
          %s323 = smul.addr %s322, 8
          %s324 = scalar_lea.vmem [#allocation5], %s323
          %325 = dma.done %s321, 128
        $region40: #{tpu_custom_call.1} parent=35 // pred_fallthru
          _
      $region36: #{tpu_custom_call.1} parent=5 // pred_fallthru
        _
    $region6: #{tpu_custom_call.1} parent=1 // loop_footer
      %s17 = sadd.s32 1, %s13
    $region7: #{tpu_custom_call.1} parent=1 // loop_footer_branch
      %12 = sbr.rel target = $region3
    $region8: #{tpu_custom_call.1} parent=1 // loop_exit
      _
    %326 = vsyncpa [#allocation3], 1
    %s327 = scalar_lea.sflag [#allocation3], 1
    %328 = vsyncpa %s327, 1
    %329 = vsyncpa [#allocation4], 1
    %s330 = scalar_lea.sflag [#allocation4], 1
    %331 = vsyncpa %s330, 1

</llo_original>
